<compile_context>
chip_gen: v7x
topology: tpu7x:2x2x1
jax: 0.10.0
libtpu: 0.0.40
codegen_flags: <defaults>
</compile_context>

<pallas_src>
import jax
import jax.numpy as jnp
import numpy as np
from jax.experimental import pallas as pl
from jax.experimental.pallas import tpu as pltpu


def attention_kernel(hp_ref, e_ref, ws_ref, v_ref, o_ref):
    # hp_ref: (Gb, M)        pre-projected hidden (+ bias), per group
    # e_ref : (Gb, S, sdim)  encoder outputs for Gb groups
    # ws_ref: (sdim, M)      encoder part of the attn weight (W^T[H:])
    # v_ref : (1, M)         v-projection weight
    # o_ref : (Gb, S)        softmax attention weights (lane-dense)
    Gb, S, sdim = e_ref.shape
    M = ws_ref.shape[1]

    # One MXU-sized matmul for all Gb*S rows of this block.
    e2 = e_ref[...].reshape(Gb * S, sdim)                          # (Gb*S, sdim)
    pre = jnp.dot(e2, ws_ref[...], preferred_element_type=jnp.float32)  # (Gb*S, M)

    # Add the hoisted hidden projection (broadcast over src_len), then tanh (EUP).
    pre = pre.reshape(Gb, S, M) + hp_ref[...][:, None, :]          # (Gb, S, M)
    energy = jnp.tanh(pre)

    # v-projection as a VPU multiply + lane reduce instead of an N=1 matmul.
    scores = jnp.sum(energy * v_ref[...][None, :, :], axis=-1)     # (Gb, S)

    # Numerically-stable softmax over src_len (last / lane axis).
    m = jnp.max(scores, axis=-1, keepdims=True)
    ex = jnp.exp(scores - m)
    o_ref[...] = (ex / jnp.sum(ex, axis=-1, keepdims=True)).astype(o_ref.dtype)


def attention_forward(hidden, encoder_outputs, w_attn, b_attn, w_v, group_block=64):
    """hidden [B, D, H_dim]; encoder_outputs [B, D, S, s_dim]; returns [B, D, S]."""
    B, D, H = hidden.shape
    _, _, S, sdim = encoder_outputs.shape
    M = w_attn.shape[0]                 # model_size
    G = B * D

    # Batch Gb groups per grid step; keep Gb a multiple of 8 (sublane) when possible.
    if G >= 8:
        Gb = min(group_block, G)
        Gb = (Gb // 8) * 8
    else:
        Gb = G
    n_blocks = -(-G // Gb)
    G_pad = n_blocks * Gb

    f32 = jnp.float32
    hidden_f = hidden.astype(f32).reshape(G, H)
    e3 = encoder_outputs.astype(f32).reshape(G, S, sdim)

    wT = w_attn.astype(f32).T           # (H + sdim, M); concat order = (hidden, enc)
    wh = wT[:H]                         # (H, M)   hidden part
    ws = wT[H:]                         # (sdim, M) encoder part
    b = b_attn.astype(f32).reshape(1, M)
    v = w_v.astype(f32).reshape(1, M)

    # Hoisted hidden projection: one fused XLA GEMM, (G, H) @ (H, M) + bias.
    h_proj = hidden_f @ wh + b          # (G, M)

    if G_pad != G:
        pad = G_pad - G
        h_proj = jnp.pad(h_proj, ((0, pad), (0, 0)))
        e3 = jnp.pad(e3, ((0, pad), (0, 0), (0, 0)))

    out = pl.pallas_call(
        attention_kernel,
        out_shape=jax.ShapeDtypeStruct((G_pad, S), jnp.float32),
        grid_spec=pltpu.PrefetchScalarGridSpec(
            num_scalar_prefetch=0,
            grid=(n_blocks,),
            in_specs=[
                pl.BlockSpec((Gb, M), lambda i: (i, 0)),          # h_proj
                pl.BlockSpec((Gb, S, sdim), lambda i: (i, 0, 0)),  # encoder outputs
                pl.BlockSpec((sdim, M), lambda i: (0, 0)),         # Ws (invariant)
                pl.BlockSpec((1, M), lambda i: (0, 0)),            # v  (invariant)
            ],
            out_specs=pl.BlockSpec((Gb, S), lambda i: (i, 0)),
        ),
        compiler_params=pltpu.CompilerParams(
            dimension_semantics=("parallel",),
        ),
    )(h_proj, e3, ws, v)

    return out[:G].reshape(B, D, S)


def attention_reference(hidden, encoder_outputs, w_attn, b_attn, w_v):
    """Pure-JAX reference matching the PyTorch forward exactly."""
    S = encoder_outputs.shape[2]
    h = jnp.repeat(hidden[:, :, None, :], S, axis=2)                 # [B, D, S, H]
    x = jnp.concatenate([h, encoder_outputs], axis=-1)               # [B, D, S, H+s]
    energy = jnp.tanh(jnp.einsum("bdsf,mf->bdsm", x, w_attn) + b_attn)
    attn = jnp.einsum("bdsm,om->bdso", energy, w_v)[..., 0]          # [B, D, S]
    return jax.nn.softmax(attn, axis=-1)


if __name__ == "__main__":
    # Small shapes consistent with the module's forward.
    B, D, S = 2, 4, 8          # batch, extra (head-like) dim, src_len
    s_dim, H_dim, model_size = 16, 16, 32

    key = jax.random.PRNGKey(0)
    k1, k2, k3, k4, k5 = jax.random.split(key, 5)

    hidden = jax.random.normal(k1, (B, D, H_dim), dtype=jnp.float32)
    encoder_outputs = jax.random.normal(k2, (B, D, S, s_dim), dtype=jnp.float32)

    # Deterministic parameter init (Linear shapes: weight [out, in], bias [out]).
    w_attn = jax.random.normal(k3, (model_size, s_dim + H_dim), dtype=jnp.float32) * 0.1
    b_attn = jax.random.normal(k4, (model_size,), dtype=jnp.float32) * 0.1
    w_v = jax.random.normal(k5, (1, model_size), dtype=jnp.float32) * 0.1

    out = attention_forward(hidden, encoder_outputs, w_attn, b_attn, w_v)
    out = jax.block_until_ready(out)

    ref = attention_reference(hidden, encoder_outputs, w_attn, b_attn, w_v)
    np.testing.assert_allclose(np.asarray(out), np.asarray(ref), rtol=1e-5, atol=1e-5)
    # rows of a softmax sum to one
    np.testing.assert_allclose(np.asarray(out).sum(-1), np.ones((B, D)), rtol=1e-5, atol=1e-5)

    print("KERNEL_OK")
</pallas_src>

<mosaic_0001>
module attributes {stable_mosaic.version = 11 : i64} {
  func.func @attention_kernel(%arg0: i32, %arg1: memref<8x32xf32, #tpu.memory_space<vmem>>, %arg2: memref<8x8x16xf32, #tpu.memory_space<vmem>>, %arg3: memref<16x32xf32, #tpu.memory_space<vmem>>, %arg4: memref<1x32xf32, #tpu.memory_space<vmem>>, %arg5: memref<8x8xf32, #tpu.memory_space<vmem>>) attributes {dimension_semantics = [#tpu.dimension_semantics<parallel>], iteration_bounds = array<i64: 1>, scalar_prefetch = 0 : i64, scratch_operands = 0 : i64, tpu.core_type = #tpu.core_type<tc>, window_params = [{transform_indices = @transform_0, window_bounds = array<i64: 8, 32>}, {transform_indices = @transform_1, window_bounds = array<i64: 8, 8, 16>}, {pipeline_mode = #tpu.pipeline_mode<synchronous>, transform_indices = @transform_2, window_bounds = array<i64: 16, 32>}, {pipeline_mode = #tpu.pipeline_mode<synchronous>, transform_indices = @transform_3, window_bounds = array<i64: 1, 32>}, {transform_indices = @transform_4, window_bounds = array<i64: 8, 8>}]} {
    %c0 = arith.constant 0 : index
    %c0_0 = arith.constant 0 : index
    %c0_1 = arith.constant 0 : index
    %0 = vector.load %arg2[%c0, %c0_0, %c0_1] : memref<8x8x16xf32, #tpu.memory_space<vmem>>, vector<8x8x16xf32>
    %1 = vector.shape_cast %0 : vector<8x8x16xf32> to vector<64x16xf32>
    %c0_2 = arith.constant 0 : index
    %c0_3 = arith.constant 0 : index
    %2 = vector.load %arg3[%c0_2, %c0_3] : memref<16x32xf32, #tpu.memory_space<vmem>>, vector<16x32xf32>
    %cst = arith.constant dense<0.000000e+00> : vector<64x32xf32>
    %3 = tpu.matmul %1, %2, %cst {dimension_numbers = #tpu.dot_dimension_numbers<[1], [0], [0], [1], [0, 0, 1, 1], [], []>} : vector<64x16xf32>, vector<16x32xf32>, vector<64x32xf32> -> vector<64x32xf32>
    %4 = vector.shape_cast %3 : vector<64x32xf32> to vector<8x8x32xf32>
    %c0_4 = arith.constant 0 : index
    %c0_5 = arith.constant 0 : index
    %5 = vector.load %arg1[%c0_4, %c0_5] : memref<8x32xf32, #tpu.memory_space<vmem>>, vector<8x32xf32>
    %6 = vector.shape_cast %5 : vector<8x32xf32> to vector<8x1x32xf32>
    %7 = vector.broadcast %6 : vector<8x1x32xf32> to vector<8x8x32xf32>
    %8 = arith.addf %4, %7 : vector<8x8x32xf32>
    %9 = math.tanh %8 : vector<8x8x32xf32>
    %c0_6 = arith.constant 0 : index
    %c0_7 = arith.constant 0 : index
    %10 = vector.load %arg4[%c0_6, %c0_7] : memref<1x32xf32, #tpu.memory_space<vmem>>, vector<1x32xf32>
    %11 = vector.shape_cast %10 : vector<1x32xf32> to vector<1x1x32xf32>
    %12 = vector.broadcast %11 : vector<1x1x32xf32> to vector<8x8x32xf32>
    %13 = arith.mulf %9, %12 : vector<8x8x32xf32>
    %cst_8 = arith.constant dense<0.000000e+00> : vector<8x8xf32>
    %14 = vector.multi_reduction <add>, %13, %cst_8 [2] : vector<8x8x32xf32> to vector<8x8xf32>
    %cst_9 = arith.constant dense<0xFF800000> : vector<8xf32>
    %15 = vector.multi_reduction <maximumf>, %14, %cst_9 [1] : vector<8x8xf32> to vector<8xf32>
    %16 = vector.shape_cast %15 : vector<8xf32> to vector<8x1xf32>
    %17 = vector.broadcast %16 : vector<8x1xf32> to vector<8x8xf32>
    %18 = arith.subf %14, %17 : vector<8x8xf32>
    %19 = math.exp %18 : vector<8x8xf32>
    %cst_10 = arith.constant dense<0.000000e+00> : vector<8xf32>
    %20 = vector.multi_reduction <add>, %19, %cst_10 [1] : vector<8x8xf32> to vector<8xf32>
    %21 = vector.shape_cast %20 : vector<8xf32> to vector<8x1xf32>
    %22 = vector.broadcast %21 : vector<8x1xf32> to vector<8x8xf32>
    %23 = arith.divf %19, %22 : vector<8x8xf32>
    %c0_11 = arith.constant 0 : index
    %c0_12 = arith.constant 0 : index
    %24 = vector.load %arg5[%c0_11, %c0_12] : memref<8x8xf32, #tpu.memory_space<vmem>>, vector<8x8xf32>
    tpu.vector_store %arg5[%c0_11, %c0_12], %23 {strides = array<i32>} : memref<8x8xf32, #tpu.memory_space<vmem>>, vector<8x8xf32>,
    return
  }
  func.func @transform_0(%arg0: i32) -> (i32, i32) {
    %c0_i32 = arith.constant 0 : i32
    %c0_i32_0 = arith.constant 0 : i32
    return %arg0, %c0_i32 : i32, i32
  }
  func.func @transform_1(%arg0: i32) -> (i32, i32, i32) {
    %c0_i32 = arith.constant 0 : i32
    %c0_i32_0 = arith.constant 0 : i32
    %c0_i32_1 = arith.constant 0 : i32
    return %arg0, %c0_i32, %c0_i32_0 : i32, i32, i32
  }
  func.func @transform_2(%arg0: i32) -> (i32, i32) {
    %c0_i32 = arith.constant 0 : i32
    %c0_i32_0 = arith.constant 0 : i32
    %c0_i32_1 = arith.constant 0 : i32
    return %c0_i32, %c0_i32_0 : i32, i32
  }
  func.func @transform_3(%arg0: i32) -> (i32, i32) {
    %c0_i32 = arith.constant 0 : i32
    %c0_i32_0 = arith.constant 0 : i32
    %c0_i32_1 = arith.constant 0 : i32
    return %c0_i32, %c0_i32_0 : i32, i32
  }
  func.func @transform_4(%arg0: i32) -> (i32, i32) {
    %c0_i32 = arith.constant 0 : i32
    %c0_i32_0 = arith.constant 0 : i32
    return %arg0, %c0_i32 : i32, i32
  }
}

</mosaic_0001>

<llo_original>
// kernel: tpu_custom_call.1
$region0: #{tpu_custom_call.1}
  #allocation0 [shape = 'u32[]', space=smem, size = 0x4, offset = 0x4, fixed_abs, tag = 'smem constant byte address 0x4 - core index']
  #allocation1 [shape = 'u32[144,128]{1,0:T(1,128)}', space=vmem, size = 0x12000, scoped, tag = 'internal scratch']
  %s0 = inlined_call_operand.hbm [shape: f32[8,32], index: 0, kind: input, shape index: {}]
  %s1 = inlined_call_operand.hbm [shape: f32[8,8,16], index: 1, kind: input, shape index: {}]
  %s2 = inlined_call_operand.hbm [shape: f32[16,32], index: 2, kind: input, shape index: {}]
  %s3 = inlined_call_operand.vmem [shape: f32[1,32], index: 3, kind: input, shape index: {}]
  %s4 = inlined_call_operand.hbm [shape: f32[8,8], index: 4, kind: output, shape index: {}]
  %s5 = sld [smem:[#allocation0]]
  $region38: #{tpu_custom_call.1} parent=0
    _
  %s7 = ssub.s32 1, %s5
  %s8 = scalar_select 0, %s7, %s5
  $region1: #{tpu_custom_call.1} parent=0
    #allocation2 [shape = 'u8[4096]{0}', space=vmem, size = 0x1000, scoped, tag = 'input window, operand 0, single buffered']
    #allocation3 [shape = 's32[1]{0}', space=sflag, size = 0x4, scoped, tag = 'scoped memory for tpu_custom_call.1']
    #allocation4 [shape = 's32[1]{0}', space=sflag, size = 0x4, scoped, tag = 'scoped memory for tpu_custom_call.1']
    #allocation5 [shape = 'u8[32768]{0}', space=vmem, size = 0x8000, scoped, tag = 'input window, operand 1, single buffered']
    #allocation6 [shape = 's32[1]{0}', space=sflag, size = 0x4, scoped, tag = 'scoped memory for tpu_custom_call.1']
    #allocation7 [shape = 'u8[8192]{0}', space=vmem, size = 0x2000, scoped, tag = 'input window, operand 2, single buffered']
    #allocation8 [shape = 'u8[4096]{0}', space=vmem, size = 0x1000, scoped, tag = 'output window, operand 0, single buffered']
    %9 = vsyncpa [#allocation3], 0
    %10 = vsyncpa [#allocation6], 0
    %11 = vsyncpa [#allocation4], 0
    // Predicated region
    $region2: #{tpu_custom_call.1} parent=1 // pred_check
      _
    $region3: #{tpu_custom_call.1} parent=1 // pred_check_branch
      %13 = sbr.rel (0) target = $region5
    $region4: #{tpu_custom_call.1} parent=1 // pred_region
      %s15 = ssub.s32 128, 128
      %16 = vsyncadd [#allocation3], %s15
      %s18 = sshll.u32 [#allocation2], 4
      %s19 = int_to_ptr.vmem [resolvable:$true] %s18
      %21 = dma.hbm_to_vmem [thread:$0]  %s0, 128, %s19, [#allocation3]
    $region5: #{tpu_custom_call.1} parent=1 // pred_fallthru
      _
    // Predicated region
    $region6: #{tpu_custom_call.1} parent=1 // pred_check
      _
    $region7: #{tpu_custom_call.1} parent=1 // pred_check_branch
      %23 = sbr.rel (0) target = $region9
    $region8: #{tpu_custom_call.1} parent=1 // pred_region
      %s25 = ssub.s32 1024, 1024
      %26 = vsyncadd [#allocation6], %s25
      %s27 = sshll.u32 [#allocation5], 4
      %s28 = int_to_ptr.vmem [resolvable:$true] %s27
      %33 = dma.hbm_to_vmem [thread:$0]  %s1, 1024, %s28, [#allocation6], 128, 128, 8
    $region9: #{tpu_custom_call.1} parent=1 // pred_fallthru
      _
    // Predicated region
    $region10: #{tpu_custom_call.1} parent=1 // pred_check
      _
    $region11: #{tpu_custom_call.1} parent=1 // pred_check_branch
      %35 = sbr.rel (0) target = $region13
    $region12: #{tpu_custom_call.1} parent=1 // pred_region
      %s37 = ssub.s32 256, 256
      %38 = vsyncadd [#allocation6], %s37
      %s39 = sshll.u32 [#allocation7], 4
      %s40 = int_to_ptr.vmem [resolvable:$true] %s39
      %45 = dma.hbm_to_vmem [thread:$0]  %s2, 256, %s40, [#allocation6], 128, 128, 8
    $region13: #{tpu_custom_call.1} parent=1 // pred_fallthru
      _
    // Predicated region
    $region14: #{tpu_custom_call.1} parent=1 // pred_check
      _
    $region15: #{tpu_custom_call.1} parent=1 // pred_check_branch
      %47 = sbr.rel (0) target = $region17
    $region16: #{tpu_custom_call.1} parent=1 // pred_region
      _
    $region17: #{tpu_custom_call.1} parent=1 // pred_fallthru
      _
    // Predicated region
    $region18: #{tpu_custom_call.1} parent=1 // pred_check
      _
    $region19: #{tpu_custom_call.1} parent=1 // pred_check_branch
      %49 = sbr.rel (0) target = $region21
    $region20: #{tpu_custom_call.1} parent=1 // pred_region
      %50 = dma.done [#allocation3], 128
    $region21: #{tpu_custom_call.1} parent=1 // pred_fallthru
      _
    // Predicated region
    $region22: #{tpu_custom_call.1} parent=1 // pred_check
      _
    $region23: #{tpu_custom_call.1} parent=1 // pred_check_branch
      %52 = sbr.rel (0) target = $region25
    $region24: #{tpu_custom_call.1} parent=1 // pred_region
      %53 = dma.done [#allocation6], 1024
    $region25: #{tpu_custom_call.1} parent=1 // pred_fallthru
      _
    // Predicated region
    $region26: #{tpu_custom_call.1} parent=1 // pred_check
      _
    $region27: #{tpu_custom_call.1} parent=1 // pred_check_branch
      %55 = sbr.rel (0) target = $region29
    $region28: #{tpu_custom_call.1} parent=1 // pred_region
      %56 = dma.done [#allocation6], 256
    $region29: #{tpu_custom_call.1} parent=1 // pred_fallthru
      _
    %v57 = vld [vmem:[#allocation5] sm:$0xff]
    %v58 = vld [vmem:[#allocation5 + $0x8] sm:$0xff]
    %v59 = vld [vmem:[#allocation5 + $0x10] sm:$0xff]
    %v60 = vld [vmem:[#allocation5 + $0x18] sm:$0xff]
    %v61 = vld [vmem:[#allocation5 + $0x20] sm:$0xff]
    %v62 = vld [vmem:[#allocation5 + $0x28] sm:$0xff]
    %v63 = vld [vmem:[#allocation5 + $0x30] sm:$0xff]
    %v64 = vld [vmem:[#allocation5 + $0x38] sm:$0xff]
    %v65 = vld [vmem:[#allocation7] sm:$0xff]
    %v66 = vld [vmem:[#allocation7 + $0x8] sm:$0xff]
    %vm67 = vcmask 130048
    %v69 = vsel %vm67, %v57, 0
    %v72 = vsel %vm67, %v58, 0
    %v75 = vsel %vm67, %v59, 0
    %v78 = vsel %vm67, %v60, 0
    %v81 = vsel %vm67, %v61, 0
    %v84 = vsel %vm67, %v62, 0
    %v87 = vsel %vm67, %v63, 0
    %v90 = vsel %vm67, %v64, 0
    %92 = vmatprep.subr.mxu0 0.0
    %93 = vmatpush1.msra.mxu0 %v65
    %94 = vmatprep.subr.mxu0 0.0
    %95 = vmatpush1.msra.mxu0 %v66
    %96 = vmatprep.subr.mxu0 0.0
    %97 = vmatpush1.msra.mxu0 0.0
    %98 = vmatprep.subr.mxu0 0.0
    %99 = vmatpush1.msra.mxu0 0.0
    %100 = vmatprep.subr.mxu0 0.0
    %101 = vmatpush1.msra.mxu0 0.0
    %102 = vmatprep.subr.mxu0 0.0
    %103 = vmatpush1.msra.mxu0 0.0
    %104 = vmatprep.subr.mxu0 0.0
    %105 = vmatpush1.msra.mxu0 0.0
    %106 = vmatprep.subr.mxu0 0.0
    %107 = vmatpush1.msra.mxu0 0.0
    %108 = vmatprep.subr.mxu0 0.0
    %109 = vmatpush1.msra.mxu0 0.0
    %110 = vmatprep.subr.mxu0 0.0
    %111 = vmatpush1.msra.mxu0 0.0
    %112 = vmatprep.subr.mxu0 0.0
    %113 = vmatpush1.msra.mxu0 0.0
    %114 = vmatprep.subr.mxu0 0.0
    %115 = vmatpush1.msra.mxu0 0.0
    %116 = vmatprep.subr.mxu0 0.0
    %117 = vmatpush1.msra.mxu0 0.0
    %118 = vmatprep.subr.mxu0 0.0
    %119 = vmatpush1.msra.mxu0 0.0
    %120 = vmatprep.subr.mxu0 0.0
    %121 = vmatpush1.msra.mxu0 0.0
    %122 = vmatprep.subr.mxu0 0.0
    %123 = vmatpush1.msra.mxu0 0.0
    %124 = vmatprep.subr.mxu0 0.0
    %125 = vmatpush1.msra.mxu0 0.0
    %126 = vmatprep.subr.mxu0 0.0
    %127 = vmatpush1.msra.mxu0 0.0
    %128 = vmatprep.subr.mxu0 0.0
    %129 = vmatpush1.msra.mxu0 0.0
    %130 = vmatprep.subr.mxu0 0.0
    %131 = vmatpush1.msra.mxu0 0.0
    %132 = vmatprep.subr.mxu0 0.0
    %133 = vmatpush1.msra.mxu0 0.0
    %134 = vmatprep.subr.mxu0 0.0
    %135 = vmatpush1.msra.mxu0 0.0
    %136 = vmatprep.subr.mxu0 0.0
    %137 = vmatpush1.msra.mxu0 0.0
    %138 = vmatprep.subr.mxu0 0.0
    %139 = vmatpush1.msra.mxu0 0.0
    %140 = vmatprep.subr.mxu0 0.0
    %141 = vmatpush1.msra.mxu0 0.0
    %142 = vmatprep.subr.mxu0 0.0
    %143 = vmatpush1.msra.mxu0 0.0
    %144 = vmatprep.subr.mxu0 0.0
    %145 = vmatpush1.msra.mxu0 0.0
    %146 = vmatprep.subr.mxu0 0.0
    %147 = vmatpush1.msra.mxu0 0.0
    %148 = vmatprep.subr.mxu0 0.0
    %149 = vmatpush1.msra.mxu0 0.0
    %150 = vmatprep.subr.mxu0 0.0
    %151 = vmatpush1.msra.mxu0 0.0
    %152 = vmatprep.subr.mxu0 0.0
    %153 = vmatpush1.msra.mxu0 0.0
    %154 = vmatprep.subr.mxu0 0.0
    %155 = vmatpush1.msra.mxu0 0.0
    %156 = vmatprep.mubr.f32.mxu0 0.0
    %157 = vmatmul.mubr.f32.gmra.mrb[0].mxu0 %v69
    %v158 = vpop.f32.mrb[0].mxu0
    %v159 = vadd.f32 0.0, %v158
    %v160 = vpop.f32.mrb[0].mxu0
    %161 = vmatprep.mubr.f32.mxu0 0.0
    %162 = vmatmul.mubr.f32.gmra.mrb[0].mxu0 %v72
    %v163 = vpop.f32.mrb[0].mxu0
    %v164 = vadd.f32 0.0, %v163
    %v165 = vpop.f32.mrb[0].mxu0
    %166 = vmatprep.mubr.f32.mxu0 0.0
    %167 = vmatmul.mubr.f32.gmra.mrb[0].mxu0 %v75
    %v168 = vpop.f32.mrb[0].mxu0
    %v169 = vadd.f32 0.0, %v168
    %v170 = vpop.f32.mrb[0].mxu0
    %171 = vmatprep.mubr.f32.mxu0 0.0
    %172 = vmatmul.mubr.f32.gmra.mrb[0].mxu0 %v78
    %v173 = vpop.f32.mrb[0].mxu0
    %v174 = vadd.f32 0.0, %v173
    %v175 = vpop.f32.mrb[0].mxu0
    %176 = vmatprep.mubr.f32.mxu0 0.0
    %177 = vmatmul.mubr.f32.gmra.mrb[0].mxu0 %v81
    %v178 = vpop.f32.mrb[0].mxu0
    %v179 = vadd.f32 0.0, %v178
    %v180 = vpop.f32.mrb[0].mxu0
    %181 = vmatprep.mubr.f32.mxu0 0.0
    %182 = vmatmul.mubr.f32.gmra.mrb[0].mxu0 %v84
    %v183 = vpop.f32.mrb[0].mxu0
    %v184 = vadd.f32 0.0, %v183
    %v185 = vpop.f32.mrb[0].mxu0
    %186 = vmatprep.mubr.f32.mxu0 0.0
    %187 = vmatmul.mubr.f32.gmra.mrb[0].mxu0 %v87
    %v188 = vpop.f32.mrb[0].mxu0
    %v189 = vadd.f32 0.0, %v188
    %v190 = vpop.f32.mrb[0].mxu0
    %191 = vmatprep.mubr.f32.mxu0 0.0
    %192 = vmatmul.mubr.f32.gmra.mrb[0].mxu0 %v90
    %v193 = vpop.f32.mrb[0].mxu0
    %v194 = vadd.f32 0.0, %v193
    %v195 = vpop.f32.mrb[0].mxu0
    %196 = vdwg.mxu0
    %v197 = vld [vmem:[#allocation2] sm:$0xff]
    %v199 = vcombine.high %v197, %v197
    %v201 = vunpack.c.l.s4 1966171168
    %v202 = vunpack.c.0.s8 %v201
    %v203 = vlaneseq
    %v204 = vshrl.u32 %v203, 7
    %v205 = vsub.s32 %v202, %v204
    %v206 = vrot.slane %v197, %v205
    %v208 = vunpack.c.l.s4 1966171168
    %v209 = vunpack.c.0.s8 %v208
    %v210 = vlaneseq
    %v211 = vshrl.u32 %v210, 7
    %v212 = vsub.s32 %v209, %v211
    %v213 = vrot.slane %v199, %v212
    %v214 = vcombine.high %v206, %v206
    %v215 = vcombine.high %v213, %v213
    %v217 = vunpack.c.l.s4 1966171168
    %v218 = vunpack.c.0.s8 %v217
    %v219 = vlaneseq
    %v220 = vshrl.u32 %v219, 7
    %v221 = vsub.s32 %v218, %v220
    %v222 = vrot.slane %v206, %v221
    %v224 = vunpack.c.l.s4 1966171168
    %v225 = vunpack.c.0.s8 %v224
    %v226 = vlaneseq
    %v227 = vshrl.u32 %v226, 7
    %v228 = vsub.s32 %v225, %v227
    %v229 = vrot.slane %v213, %v228
    %v231 = vunpack.c.l.s4 1966171168
    %v232 = vunpack.c.0.s8 %v231
    %v233 = vlaneseq
    %v234 = vshrl.u32 %v233, 7
    %v235 = vsub.s32 %v232, %v234
    %v236 = vrot.slane %v214, %v235
    %v238 = vunpack.c.l.s4 1966171168
    %v239 = vunpack.c.0.s8 %v238
    %v240 = vlaneseq
    %v241 = vshrl.u32 %v240, 7
    %v242 = vsub.s32 %v239, %v241
    %v243 = vrot.slane %v215, %v242
    %v244 = vcombine.high %v222, %v222
    %v245 = vcombine.high %v229, %v229
    %v246 = vcombine.high %v236, %v236
    %v247 = vcombine.high %v243, %v243
    %v248 = vlaneseq
    %v249 = vshrl.u32 %v248, 7
    %v250 = vsub.s32 0, %v249
    %v251 = vrot.slane %v222, %v250
    %v252 = vlaneseq
    %v253 = vshrl.u32 %v252, 7
    %v254 = vsub.s32 0, %v253
    %v255 = vrot.slane %v236, %v254
    %v256 = vlaneseq
    %v257 = vshrl.u32 %v256, 7
    %v258 = vsub.s32 0, %v257
    %v259 = vrot.slane %v244, %v258
    %v260 = vlaneseq
    %v261 = vshrl.u32 %v260, 7
    %v262 = vsub.s32 0, %v261
    %v263 = vrot.slane %v246, %v262
    %v264 = vlaneseq
    %v265 = vshrl.u32 %v264, 7
    %v266 = vsub.s32 0, %v265
    %v267 = vrot.slane %v229, %v266
    %v268 = vlaneseq
    %v269 = vshrl.u32 %v268, 7
    %v270 = vsub.s32 0, %v269
    %v271 = vrot.slane %v243, %v270
    %v272 = vlaneseq
    %v273 = vshrl.u32 %v272, 7
    %v274 = vsub.s32 0, %v273
    %v275 = vrot.slane %v245, %v274
    %v276 = vlaneseq
    %v277 = vshrl.u32 %v276, 7
    %v278 = vsub.s32 0, %v277
    %v279 = vrot.slane %v247, %v278
    %v288 = vadd.f32 %v159, %v251
    %v289 = vadd.f32 %v164, %v255
    %v290 = vadd.f32 %v169, %v259
    %v291 = vadd.f32 %v174, %v263
    %v292 = vadd.f32 %v179, %v267
    %v293 = vadd.f32 %v184, %v271
    %v294 = vadd.f32 %v189, %v275
    %v295 = vadd.f32 %v194, %v279
    %v296 = vtanh.pop %v288
    %v297 = vtanh.pop %v289
    %v298 = vtanh.pop %v290
    %v299 = vtanh.pop %v291
    %v300 = vtanh.pop %v292
    %v301 = vtanh.pop %v293
    %v302 = vtanh.pop %v294
    %v303 = vtanh.pop %v295
    %v304 = vld [vmem:[%s3] sm:$0x1]
    %v306 = vlaneseq
    %v307 = vshrl.u32 %v306, 7
    %v308 = vsub.s32 0, %v307
    %v309 = vrot.slane %v304, %v308
    %v311 = vmul.f32 %v296, %v309
    %v312 = vmul.f32 %v297, %v309
    %v313 = vmul.f32 %v298, %v309
    %v314 = vmul.f32 %v299, %v309
    %v315 = vmul.f32 %v300, %v309
    %v316 = vmul.f32 %v301, %v309
    %v317 = vmul.f32 %v302, %v309
    %v318 = vmul.f32 %v303, %v309
    %vm319 = vcmask 261120
    %v320 = vsel %vm319, %v311, 0.0
    %321 = vadd.xlane.f32.xlu0 %v320
    %v322 = vpop.xlane.xlu0 %321
    %v323 = vsel %vm319, %v312, 0.0
    %324 = vadd.xlane.f32.xlu0 %v323
    %v325 = vpop.xlane.xlu0 %324
    %v326 = vsel %vm319, %v313, 0.0
    %327 = vadd.xlane.f32.xlu0 %v326
    %v328 = vpop.xlane.xlu0 %327
    %v329 = vsel %vm319, %v314, 0.0
    %330 = vadd.xlane.f32.xlu0 %v329
    %v331 = vpop.xlane.xlu0 %330
    %v332 = vsel %vm319, %v315, 0.0
    %333 = vadd.xlane.f32.xlu0 %v332
    %v334 = vpop.xlane.xlu0 %333
    %v335 = vsel %vm319, %v316, 0.0
    %336 = vadd.xlane.f32.xlu0 %v335
    %v337 = vpop.xlane.xlu0 %336
    %v338 = vsel %vm319, %v317, 0.0
    %339 = vadd.xlane.f32.xlu0 %v338
    %v340 = vpop.xlane.xlu0 %339
    %v341 = vsel %vm319, %v318, 0.0
    %342 = vadd.xlane.f32.xlu0 %v341
    %v343 = vpop.xlane.xlu0 %342
    %v352 = vlaneseq
    %v353 = vand.u32 %v352, 127
    %v354 = vlaneseq
    %v355 = vshrl.u32 %v354, 7
    %v356 = vsub.s32 %v353, %v355
    %v357 = vrot.slane %v322, %v356
    %v358 = vlaneseq
    %v359 = vshrl.u32 %v358, 7
    %v360 = vsub.s32 %v353, %v359
    %v361 = vrot.slane %v325, %v360
    %v362 = vlaneseq
    %v363 = vshrl.u32 %v362, 7
    %v364 = vsub.s32 %v353, %v363
    %v365 = vrot.slane %v328, %v364
    %v366 = vlaneseq
    %v367 = vshrl.u32 %v366, 7
    %v368 = vsub.s32 %v353, %v367
    %v369 = vrot.slane %v331, %v368
    %v370 = vlaneseq
    %v371 = vshrl.u32 %v370, 7
    %v372 = vsub.s32 %v353, %v371
    %v373 = vrot.slane %v334, %v372
    %v374 = vlaneseq
    %v375 = vshrl.u32 %v374, 7
    %v376 = vsub.s32 %v353, %v375
    %v377 = vrot.slane %v337, %v376
    %v378 = vlaneseq
    %v379 = vshrl.u32 %v378, 7
    %v380 = vsub.s32 %v353, %v379
    %v381 = vrot.slane %v340, %v380
    %v382 = vlaneseq
    %v383 = vshrl.u32 %v382, 7
    %v384 = vsub.s32 %v353, %v383
    %v385 = vrot.slane %v343, %v384
    %vm386 = vcmask 1041409
    %v387 = vsel %vm386, %v361, %v357
    %vm388 = vcmask 1042434
    %v389 = vsel %vm388, %v365, %v387
    %vm390 = vcmask 1043459
    %v391 = vsel %vm390, %v369, %v389
    %vm392 = vcmask 1044484
    %v393 = vsel %vm392, %v373, %v391
    %vm394 = vcmask 1045509
    %v395 = vsel %vm394, %v377, %v393
    %vm396 = vcmask 1046534
    %v397 = vsel %vm396, %v381, %v395
    %vm398 = vcmask 1047559
    %v399 = vsel %vm398, %v385, %v397
    %vm401 = vcmask 64512
    %v402 = vsel %vm401, %v399, -inf
    %403 = vmax.xlane.f32.xlu0 %v402
    %v404 = vpop.xlane.xlu0 %403
    %v406 = vlaneseq
    %v407 = vshrl.u32 %v406, 7
    %v408 = vsub.s32 0, %v407
    %v409 = vrot.slane %v404, %v408
    %v410 = vlaneseq
    %v411 = vshrl.u32 %v410, 7
    %v412 = vsub.s32 1, %v411
    %v413 = vrot.slane %v404, %v412
    %v414 = vlaneseq
    %v415 = vshrl.u32 %v414, 7
    %v416 = vsub.s32 2, %v415
    %v417 = vrot.slane %v404, %v416
    %v418 = vlaneseq
    %v419 = vshrl.u32 %v418, 7
    %v420 = vsub.s32 3, %v419
    %v421 = vrot.slane %v404, %v420
    %v422 = vlaneseq
    %v423 = vshrl.u32 %v422, 7
    %v424 = vsub.s32 4, %v423
    %v425 = vrot.slane %v404, %v424
    %v426 = vlaneseq
    %v427 = vshrl.u32 %v426, 7
    %v428 = vsub.s32 5, %v427
    %v429 = vrot.slane %v404, %v428
    %v430 = vlaneseq
    %v431 = vshrl.u32 %v430, 7
    %v432 = vsub.s32 6, %v431
    %v433 = vrot.slane %v404, %v432
    %v434 = vlaneseq
    %v435 = vshrl.u32 %v434, 7
    %v436 = vsub.s32 7, %v435
    %v437 = vrot.slane %v404, %v436
    %v446 = vsub.f32 %v322, %v409
    %v447 = vsub.f32 %v325, %v413
    %v448 = vsub.f32 %v328, %v417
    %v449 = vsub.f32 %v331, %v421
    %v450 = vsub.f32 %v334, %v425
    %v451 = vsub.f32 %v337, %v429
    %v452 = vsub.f32 %v340, %v433
    %v453 = vsub.f32 %v343, %v437
    %v454 = vmul.f32 %v446, 1.442695
    %v455 = vpow.pop %v454
    %v456 = vmul.f32 %v447, 1.442695
    %v457 = vpow.pop %v456
    %v458 = vmul.f32 %v448, 1.442695
    %v459 = vpow.pop %v458
    %v460 = vmul.f32 %v449, 1.442695
    %v461 = vpow.pop %v460
    %v462 = vmul.f32 %v450, 1.442695
    %v463 = vpow.pop %v462
    %v464 = vmul.f32 %v451, 1.442695
    %v465 = vpow.pop %v464
    %v466 = vmul.f32 %v452, 1.442695
    %v467 = vpow.pop %v466
    %v468 = vmul.f32 %v453, 1.442695
    %v469 = vpow.pop %v468
    %478 = vset.pattern.permute.xlu0 0
    %479 = vperm.xlu0 %478, %v455
    %v480 = vpop.permute.xlu0 %479
    %481 = vset.pattern.permute.xlu0 0
    %482 = vperm.xlu0 %481, %v457
    %v483 = vpop.permute.xlu0 %482
    %484 = vset.pattern.permute.xlu0 0
    %485 = vperm.xlu0 %484, %v459
    %v486 = vpop.permute.xlu0 %485
    %487 = vset.pattern.permute.xlu0 0
    %488 = vperm.xlu0 %487, %v461
    %v489 = vpop.permute.xlu0 %488
    %490 = vset.pattern.permute.xlu0 0
    %491 = vperm.xlu0 %490, %v463
    %v492 = vpop.permute.xlu0 %491
    %493 = vset.pattern.permute.xlu0 0
    %494 = vperm.xlu0 %493, %v465
    %v495 = vpop.permute.xlu0 %494
    %496 = vset.pattern.permute.xlu0 0
    %497 = vperm.xlu0 %496, %v467
    %v498 = vpop.permute.xlu0 %497
    %499 = vset.pattern.permute.xlu0 0
    %500 = vperm.xlu0 %499, %v469
    %v501 = vpop.permute.xlu0 %500
    %v502 = vlaneseq
    %v503 = vshrl.u32 %v502, 7
    %v504 = vsub.s32 %v353, %v503
    %v505 = vrot.slane %v480, %v504
    %v506 = vlaneseq
    %v507 = vshrl.u32 %v506, 7
    %v508 = vsub.s32 %v353, %v507
    %v509 = vrot.slane %v483, %v508
    %v510 = vlaneseq
    %v511 = vshrl.u32 %v510, 7
    %v512 = vsub.s32 %v353, %v511
    %v513 = vrot.slane %v486, %v512
    %v514 = vlaneseq
    %v515 = vshrl.u32 %v514, 7
    %v516 = vsub.s32 %v353, %v515
    %v517 = vrot.slane %v489, %v516
    %v518 = vlaneseq
    %v519 = vshrl.u32 %v518, 7
    %v520 = vsub.s32 %v353, %v519
    %v521 = vrot.slane %v492, %v520
    %v522 = vlaneseq
    %v523 = vshrl.u32 %v522, 7
    %v524 = vsub.s32 %v353, %v523
    %v525 = vrot.slane %v495, %v524
    %v526 = vlaneseq
    %v527 = vshrl.u32 %v526, 7
    %v528 = vsub.s32 %v353, %v527
    %v529 = vrot.slane %v498, %v528
    %v530 = vlaneseq
    %v531 = vshrl.u32 %v530, 7
    %v532 = vsub.s32 %v353, %v531
    %v533 = vrot.slane %v501, %v532
    %v534 = vsel %vm386, %v509, %v505
    %v535 = vsel %vm388, %v513, %v534
    %v536 = vsel %vm390, %v517, %v535
    %v537 = vsel %vm392, %v521, %v536
    %v538 = vsel %vm394, %v525, %v537
    %v539 = vsel %vm396, %v529, %v538
    %v540 = vsel %vm398, %v533, %v539
    %v542 = vsel %vm401, %v540, 0.0
    %543 = vadd.xlane.f32.xlu0 %v542
    %v544 = vpop.xlane.xlu0 %543
    %v546 = vlaneseq
    %v547 = vshrl.u32 %v546, 7
    %v548 = vsub.s32 0, %v547
    %v549 = vrot.slane %v544, %v548
    %v550 = vlaneseq
    %v551 = vshrl.u32 %v550, 7
    %v552 = vsub.s32 1, %v551
    %v553 = vrot.slane %v544, %v552
    %v554 = vlaneseq
    %v555 = vshrl.u32 %v554, 7
    %v556 = vsub.s32 2, %v555
    %v557 = vrot.slane %v544, %v556
    %v558 = vlaneseq
    %v559 = vshrl.u32 %v558, 7
    %v560 = vsub.s32 3, %v559
    %v561 = vrot.slane %v544, %v560
    %v562 = vlaneseq
    %v563 = vshrl.u32 %v562, 7
    %v564 = vsub.s32 4, %v563
    %v565 = vrot.slane %v544, %v564
    %v566 = vlaneseq
    %v567 = vshrl.u32 %v566, 7
    %v568 = vsub.s32 5, %v567
    %v569 = vrot.slane %v544, %v568
    %v570 = vlaneseq
    %v571 = vshrl.u32 %v570, 7
    %v572 = vsub.s32 6, %v571
    %v573 = vrot.slane %v544, %v572
    %v574 = vlaneseq
    %v575 = vshrl.u32 %v574, 7
    %v576 = vsub.s32 7, %v575
    %v577 = vrot.slane %v544, %v576
    %v586 = vrcp.pop %v549
    %v587 = vmul.f32 %v455, %v586
    %v588 = vrcp.pop %v553
    %v589 = vmul.f32 %v457, %v588
    %v590 = vrcp.pop %v557
    %v591 = vmul.f32 %v459, %v590
    %v592 = vrcp.pop %v561
    %v593 = vmul.f32 %v461, %v592
    %v594 = vrcp.pop %v565
    %v595 = vmul.f32 %v463, %v594
    %v596 = vrcp.pop %v569
    %v597 = vmul.f32 %v465, %v596
    %v598 = vrcp.pop %v573
    %v599 = vmul.f32 %v467, %v598
    %v600 = vrcp.pop %v577
    %v601 = vmul.f32 %v469, %v600
    %610 = vset.pattern.permute.xlu0 0
    %611 = vperm.xlu0 %610, %v587
    %v612 = vpop.permute.xlu0 %611
    %613 = vset.pattern.permute.xlu0 0
    %614 = vperm.xlu0 %613, %v589
    %v615 = vpop.permute.xlu0 %614
    %616 = vset.pattern.permute.xlu0 0
    %617 = vperm.xlu0 %616, %v591
    %v618 = vpop.permute.xlu0 %617
    %619 = vset.pattern.permute.xlu0 0
    %620 = vperm.xlu0 %619, %v593
    %v621 = vpop.permute.xlu0 %620
    %622 = vset.pattern.permute.xlu0 0
    %623 = vperm.xlu0 %622, %v595
    %v624 = vpop.permute.xlu0 %623
    %625 = vset.pattern.permute.xlu0 0
    %626 = vperm.xlu0 %625, %v597
    %v627 = vpop.permute.xlu0 %626
    %628 = vset.pattern.permute.xlu0 0
    %629 = vperm.xlu0 %628, %v599
    %v630 = vpop.permute.xlu0 %629
    %631 = vset.pattern.permute.xlu0 0
    %632 = vperm.xlu0 %631, %v601
    %v633 = vpop.permute.xlu0 %632
    %v634 = vlaneseq
    %v635 = vshrl.u32 %v634, 7
    %v636 = vsub.s32 %v353, %v635
    %v637 = vrot.slane %v612, %v636
    %v638 = vlaneseq
    %v639 = vshrl.u32 %v638, 7
    %v640 = vsub.s32 %v353, %v639
    %v641 = vrot.slane %v615, %v640
    %v642 = vlaneseq
    %v643 = vshrl.u32 %v642, 7
    %v644 = vsub.s32 %v353, %v643
    %v645 = vrot.slane %v618, %v644
    %v646 = vlaneseq
    %v647 = vshrl.u32 %v646, 7
    %v648 = vsub.s32 %v353, %v647
    %v649 = vrot.slane %v621, %v648
    %v650 = vlaneseq
    %v651 = vshrl.u32 %v650, 7
    %v652 = vsub.s32 %v353, %v651
    %v653 = vrot.slane %v624, %v652
    %v654 = vlaneseq
    %v655 = vshrl.u32 %v654, 7
    %v656 = vsub.s32 %v353, %v655
    %v657 = vrot.slane %v627, %v656
    %v658 = vlaneseq
    %v659 = vshrl.u32 %v658, 7
    %v660 = vsub.s32 %v353, %v659
    %v661 = vrot.slane %v630, %v660
    %v662 = vlaneseq
    %v663 = vshrl.u32 %v662, 7
    %v664 = vsub.s32 %v353, %v663
    %v665 = vrot.slane %v633, %v664
    %v666 = vsel %vm386, %v641, %v637
    %v667 = vsel %vm388, %v645, %v666
    %v668 = vsel %vm390, %v649, %v667
    %v669 = vsel %vm392, %v653, %v668
    %v670 = vsel %vm394, %v657, %v669
    %v671 = vsel %vm396, %v661, %v670
    %v672 = vsel %vm398, %v665, %v671
    %674 = vst.msk [vmem:[#allocation8] sm:$0xff] %vm401, %v672
    // Predicated region
    $region30: #{tpu_custom_call.1} parent=1 // pred_check
      _
    $region31: #{tpu_custom_call.1} parent=1 // pred_check_branch
      %676 = sbr.rel (0) target = $region33
    $region32: #{tpu_custom_call.1} parent=1 // pred_region
      %s678 = ssub.s32 128, 128
      %679 = vsyncadd [#allocation4], %s678
      %s681 = sshll.u32 [#allocation8], 4
      %s682 = int_to_ptr.vmem [resolvable:$true] %s681
      %684 = dma.vmem_to_hbm [thread:$0]  %s682, 128, %s4, [#allocation4]
    $region33: #{tpu_custom_call.1} parent=1 // pred_fallthru
      _
    // Predicated region
    $region34: #{tpu_custom_call.1} parent=1 // pred_check
      _
    $region35: #{tpu_custom_call.1} parent=1 // pred_check_branch
      %686 = sbr.rel (0) target = $region37
    $region36: #{tpu_custom_call.1} parent=1 // pred_region
      %687 = dma.done [#allocation4], 128
    $region37: #{tpu_custom_call.1} parent=1 // pred_fallthru
      _
    %688 = vsyncpa [#allocation3], 1
    %689 = vsyncpa [#allocation6], 1
    %690 = vsyncpa [#allocation4], 1

</llo_original>
